<compile_context>
chip_gen: v6e
topology: v6e:2x2x1
jax: 0.10.0
libtpu: 0.0.40
codegen_flags: <defaults>
</compile_context>

<pallas_src>
import jax
import jax.numpy as jnp
from jax import lax
from jax.experimental import pallas as pl
from jax.experimental.pallas import tpu as pltpu


def _pick_t_block(T: int) -> int:
    """Largest lane-aligned T tile that divides T; else whole axis (always legal)."""
    for cand in (512, 256, 128):
        if T % cand == 0:
            return cand
    return T


def _clusterer_kernel(att_ref, len_ref, sent_att_ref, sorted_idx_ref):
    t = pl.program_id(1)
    nt = pl.num_programs(1)

    # Partial sum over this T tile. Attention stays in its native (possibly
    # narrow) dtype through the HBM read; upcast to f32 per tile here.
    part = jnp.sum(att_ref[...].astype(jnp.float32), axis=-1)      # (1, C, S)

    @pl.when(t == 0)
    def _():
        sent_att_ref[...] = jnp.zeros_like(sent_att_ref)

    # Output block index is constant along the T grid axis -> resident
    # accumulator in VMEM.
    sent_att_ref[...] += part

    @pl.when(t == nt - 1)
    def _():
        lengths = len_ref[...]                                     # (1, 1, S)
        sa = sent_att_ref[...]                                     # (1, C, S) f32
        # Masked (zero-length) sentences forced to -1, as in the PyTorch module.
        sa = jnp.where(lengths == 0, jnp.float32(-1.0), sa)
        sent_att_ref[...] = sa

        S = sa.shape[-1]
        # Stable descending argsort via O(S^2) rank trick (S is small):
        #   rank[s] = #{j : v[j] > v[s]} + #{j < s : v[j] == v[s]}
        v_i = sa[..., :, None]                                     # (1, C, S, 1)
        v_j = sa[..., None, :]                                     # (1, C, 1, S)
        row = lax.broadcasted_iota(jnp.int32, (S, S), 0)           # "s" index
        col = lax.broadcasted_iota(jnp.int32, (S, S), 1)           # "j"/"pos" index
        before = (v_j > v_i) | ((v_j == v_i) & (col < row))        # (1, C, S, S)
        rank = jnp.sum(before.astype(jnp.int32), axis=-1)          # (1, C, S)

        # Invert the permutation: sorted_idx[i] = s such that rank[s] == i.
        onehot = (rank[..., :, None] == col).astype(jnp.int32)     # (1,C,S(s),S(i))
        sorted_idx_ref[...] = jnp.sum(onehot * row, axis=-2)       # (1, C, S)


def clusterer_core(attention, lengths):
    """Pallas kernel call: returns (sentence_attention f32, sorted_indices i32)."""
    B, C, S, T = attention.shape
    t_blk = _pick_t_block(T)
    nt = T // t_blk
    lengths3 = lengths.reshape(B, 1, S).astype(jnp.int32)

    return pl.pallas_call(
        _clusterer_kernel,
        out_shape=(
            jax.ShapeDtypeStruct((B, C, S), jnp.float32),
            jax.ShapeDtypeStruct((B, C, S), jnp.int32),
        ),
        grid=(B, nt),
        in_specs=[
            pl.BlockSpec((1, C, S, t_blk), lambda b, t: (b, 0, 0, t)),
            pl.BlockSpec((1, 1, S), lambda b, t: (b, 0, 0)),
        ],
        out_specs=(
            pl.BlockSpec((1, C, S), lambda b, t: (b, 0, 0)),
            pl.BlockSpec((1, C, S), lambda b, t: (b, 0, 0)),
        ),
        compiler_params=pltpu.CompilerParams(
            dimension_semantics=("parallel", "arbitrary"),
        ),
    )(attention, lengths3)


def clusterer_forward(article_sentences, article_sentences_lengths, attention, num_codes):
    """Full forward pass matching the PyTorch Clusterer module."""
    lengths = article_sentences_lengths.astype(jnp.int32)
    # Pass attention in its native dtype; the kernel upcasts per tile.
    sent_att, sorted_idx = clusterer_core(attention, lengths)
    num_sentences = jnp.sum(lengths != 0, axis=1)

    # TODO(synk): the duplicate-sentence grouping builds ragged nested Python
    # lists keyed by a dict -- no Pallas equivalent; done on host, like PyTorch.
    # Single batched D2H transfer for all host-side inputs.
    sorted_idx_h, sents_h, num_sent_h, num_codes_h = jax.device_get(
        (sorted_idx, article_sentences, num_sentences, num_codes)
    )

    clustering = []
    for b in range(sorted_idx_h.shape[0]):
        clustering.append([])
        for c in range(int(num_codes_h[b])):
            clustering[-1].append([])
            groups = {}
            for i in range(int(num_sent_h[b])):
                s = int(sorted_idx_h[b, c, i])
                sentence = tuple(sents_h[b, s].tolist())
                if sentence not in groups:
                    groups[sentence] = len(groups)
                    clustering[-1][-1].append([])
                clustering[-1][-1][groups[sentence]].append(s)
    return clustering, sent_att, sorted_idx


if __name__ == "__main__":
    key = jax.random.PRNGKey(0)
    k1, k2, k3, k4 = jax.random.split(key, 4)

    B, C, S, T, L = 2, 4, 8, 128, 6  # batch, codes, sentences, attn width, tokens/sentence

    # Token ids from a tiny vocab so duplicate sentences occur (exercises grouping).
    article_sentences = jax.random.randint(k1, (B, S, L), 0, 3, dtype=jnp.int32)
    # Some zero lengths -> masked sentences.
    article_sentences_lengths = jax.random.randint(k2, (B, S), 0, 4, dtype=jnp.int32)
    attention = jax.random.uniform(k3, (B, C, S, T), dtype=jnp.float32)
    num_codes = jnp.array([C, C - 1], dtype=jnp.int32)

    clustering, sent_att, sorted_idx = clusterer_forward(
        article_sentences, article_sentences_lengths, attention, num_codes
    )
    jax.block_until_ready((sent_att, sorted_idx))

    # Pure-JAX reference check of the kernel's hot path.
    ref_sa = jnp.sum(attention.astype(jnp.float32), axis=-1)
    ref_sa = jnp.where((article_sentences_lengths == 0)[:, None, :],
                       jnp.float32(-1.0), ref_sa)
    ref_sorted = jnp.argsort(-ref_sa, axis=-1, stable=True).astype(jnp.int32)

    assert jnp.allclose(sent_att, ref_sa, rtol=1e-5, atol=1e-5), "sentence_attention mismatch"
    assert jnp.array_equal(sorted_idx, ref_sorted), "sorted indices mismatch"
    assert len(clustering) == B
    assert len(clustering[0]) == int(num_codes[0]) and len(clustering[1]) == int(num_codes[1])

    print("KERNEL_OK")
</pallas_src>

<mosaic_0001>
module attributes {stable_mosaic.version = 11 : i64} {
  func.func @_clusterer_kernel(%arg0: i32, %arg1: i32, %arg2: memref<1x4x8x128xf32, #tpu.memory_space<vmem>>, %arg3: memref<1x1x8xi32, #tpu.memory_space<vmem>>, %arg4: memref<1x4x8xf32, #tpu.memory_space<vmem>>, %arg5: memref<1x4x8xi32, #tpu.memory_space<vmem>>) attributes {dimension_semantics = [#tpu.dimension_semantics<parallel>, #tpu.dimension_semantics<arbitrary>], iteration_bounds = array<i64: 2, 1>, scalar_prefetch = 0 : i64, scratch_operands = 0 : i64, tpu.core_type = #tpu.core_type<tc>, window_params = [{transform_indices = @transform_0, window_bounds = array<i64: 1, 4, 8, 128>}, {transform_indices = @transform_1, window_bounds = array<i64: 1, 1, 8>}, {transform_indices = @transform_2, window_bounds = array<i64: 1, 4, 8>}, {transform_indices = @transform_3, window_bounds = array<i64: 1, 4, 8>}]} {
    %c0 = arith.constant 0 : index
    %c0_0 = arith.constant 0 : index
    %c0_1 = arith.constant 0 : index
    %c0_2 = arith.constant 0 : index
    %0 = vector.load %arg2[%c0, %c0_0, %c0_1, %c0_2] : memref<1x4x8x128xf32, #tpu.memory_space<vmem>>, vector<1x4x8x128xf32>
    %cst = arith.constant dense<0.000000e+00> : vector<1x4x8xf32>
    %1 = vector.multi_reduction <add>, %0, %cst [3] : vector<1x4x8x128xf32> to vector<1x4x8xf32>
    %c0_i32 = arith.constant 0 : i32
    %2 = arith.cmpi eq, %arg1, %c0_i32 : i32
    %3 = arith.extui %2 : i1 to i32
    %c0_i32_3 = arith.constant 0 : i32
    %4 = arith.cmpi ne, %3, %c0_i32_3 : i32
    scf.if %4 {
      %cst_12 = arith.constant 0.000000e+00 : f32
      %11 = vector.broadcast %cst_12 : f32 to vector<1x4x8xf32>
      %c0_13 = arith.constant 0 : index
      %c0_14 = arith.constant 0 : index
      %c0_15 = arith.constant 0 : index
      %12 = vector.load %arg4[%c0_13, %c0_14, %c0_15] : memref<1x4x8xf32, #tpu.memory_space<vmem>>, vector<1x4x8xf32>
      tpu.vector_store %arg4[%c0_13, %c0_14, %c0_15], %11 {strides = array<i32>} : memref<1x4x8xf32, #tpu.memory_space<vmem>>, vector<1x4x8xf32>,
    } else {
    }
    %c0_4 = arith.constant 0 : index
    %c0_5 = arith.constant 0 : index
    %c0_6 = arith.constant 0 : index
    %5 = vector.load %arg4[%c0_4, %c0_5, %c0_6] : memref<1x4x8xf32, #tpu.memory_space<vmem>>, vector<1x4x8xf32>
    %6 = arith.addf %5, %1 : vector<1x4x8xf32>
    %c0_7 = arith.constant 0 : index
    %c0_8 = arith.constant 0 : index
    %c0_9 = arith.constant 0 : index
    %7 = vector.load %arg4[%c0_7, %c0_8, %c0_9] : memref<1x4x8xf32, #tpu.memory_space<vmem>>, vector<1x4x8xf32>
    tpu.vector_store %arg4[%c0_7, %c0_8, %c0_9], %6 {strides = array<i32>} : memref<1x4x8xf32, #tpu.memory_space<vmem>>, vector<1x4x8xf32>,
    %c0_i32_10 = arith.constant 0 : i32
    %8 = arith.cmpi eq, %arg1, %c0_i32_10 : i32
    %9 = arith.extui %8 : i1 to i32
    %c0_i32_11 = arith.constant 0 : i32
    %10 = arith.cmpi ne, %9, %c0_i32_11 : i32
    scf.if %10 {
      %c0_12 = arith.constant 0 : index
      %c0_13 = arith.constant 0 : index
      %c0_14 = arith.constant 0 : index
      %11 = vector.load %arg3[%c0_12, %c0_13, %c0_14] : memref<1x1x8xi32, #tpu.memory_space<vmem>>, vector<1x1x8xi32>
      %c0_15 = arith.constant 0 : index
      %c0_16 = arith.constant 0 : index
      %c0_17 = arith.constant 0 : index
      %12 = vector.load %arg4[%c0_15, %c0_16, %c0_17] : memref<1x4x8xf32, #tpu.memory_space<vmem>>, vector<1x4x8xf32>
      %c0_i32_18 = arith.constant 0 : i32
      %13 = vector.broadcast %c0_i32_18 : i32 to vector<1x1x8xi32>
      %14 = arith.cmpi eq, %11, %13 : vector<1x1x8xi32>
      %cst_19 = arith.constant -1.000000e+00 : f32
      %15 = vector.shape_cast %14 : vector<1x1x8xi1> to vector<1x1x8xi1>
      %16 = vector.broadcast %15 : vector<1x1x8xi1> to vector<1x4x8xi1>
      %17 = vector.broadcast %cst_19 : f32 to vector<1x4x8xf32>
      %18 = arith.select %16, %17, %12 : vector<1x4x8xi1>, vector<1x4x8xf32>
      %c0_20 = arith.constant 0 : index
      %c0_21 = arith.constant 0 : index
      %c0_22 = arith.constant 0 : index
      %19 = vector.load %arg4[%c0_20, %c0_21, %c0_22] : memref<1x4x8xf32, #tpu.memory_space<vmem>>, vector<1x4x8xf32>
      tpu.vector_store %arg4[%c0_20, %c0_21, %c0_22], %18 {strides = array<i32>} : memref<1x4x8xf32, #tpu.memory_space<vmem>>, vector<1x4x8xf32>,
      %20 = vector.shape_cast %18 : vector<1x4x8xf32> to vector<1x4x8x1xf32>
      %21 = vector.shape_cast %18 : vector<1x4x8xf32> to vector<1x4x1x8xf32>
      %22 = tpu.iota {dimensions = array<i32: 0>} : vector<8x8xi32>
      %23 = tpu.iota {dimensions = array<i32: 1>} : vector<8x8xi32>
      %24 = vector.broadcast %21 : vector<1x4x1x8xf32> to vector<1x4x8x8xf32>
      %25 = vector.broadcast %20 : vector<1x4x8x1xf32> to vector<1x4x8x8xf32>
      %26 = arith.cmpf ogt, %24, %25 : vector<1x4x8x8xf32>
      %27 = vector.broadcast %21 : vector<1x4x1x8xf32> to vector<1x4x8x8xf32>
      %28 = vector.broadcast %20 : vector<1x4x8x1xf32> to vector<1x4x8x8xf32>
      %29 = arith.cmpf oeq, %27, %28 : vector<1x4x8x8xf32>
      %30 = arith.cmpi slt, %23, %22 : vector<8x8xi32>
      %31 = vector.shape_cast %30 : vector<8x8xi1> to vector<1x1x8x8xi1>
      %32 = vector.broadcast %31 : vector<1x1x8x8xi1> to vector<1x4x8x8xi1>
      %33 = arith.andi %29, %32 : vector<1x4x8x8xi1>
      %34 = arith.ori %26, %33 : vector<1x4x8x8xi1>
      %35 = arith.extui %34 : vector<1x4x8x8xi1> to vector<1x4x8x8xi32>
      %cst_23 = arith.constant dense<0> : vector<1x4x8xi32>
      %36 = vector.multi_reduction <add>, %35, %cst_23 [3] : vector<1x4x8x8xi32> to vector<1x4x8xi32>
      %37 = vector.shape_cast %36 : vector<1x4x8xi32> to vector<1x4x8x1xi32>
      %38 = vector.shape_cast %23 : vector<8x8xi32> to vector<1x1x8x8xi32>
      %39 = vector.broadcast %37 : vector<1x4x8x1xi32> to vector<1x4x8x8xi32>
      %40 = vector.broadcast %38 : vector<1x1x8x8xi32> to vector<1x4x8x8xi32>
      %41 = arith.cmpi eq, %39, %40 : vector<1x4x8x8xi32>
      %42 = arith.extui %41 : vector<1x4x8x8xi1> to vector<1x4x8x8xi32>
      %43 = vector.shape_cast %22 : vector<8x8xi32> to vector<1x1x8x8xi32>
      %44 = vector.broadcast %43 : vector<1x1x8x8xi32> to vector<1x4x8x8xi32>
      %45 = arith.muli %42, %44 : vector<1x4x8x8xi32>
      %cst_24 = arith.constant dense<0> : vector<1x4x8xi32>
      %46 = vector.multi_reduction <add>, %45, %cst_24 [2] : vector<1x4x8x8xi32> to vector<1x4x8xi32>
      %c0_25 = arith.constant 0 : index
      %c0_26 = arith.constant 0 : index
      %c0_27 = arith.constant 0 : index
      %47 = vector.load %arg5[%c0_25, %c0_26, %c0_27] : memref<1x4x8xi32, #tpu.memory_space<vmem>>, vector<1x4x8xi32>
      tpu.vector_store %arg5[%c0_25, %c0_26, %c0_27], %46 {strides = array<i32>} : memref<1x4x8xi32, #tpu.memory_space<vmem>>, vector<1x4x8xi32>,
    } else {
    }
    return
  }
  func.func @transform_0(%arg0: i32, %arg1: i32) -> (i32, i32, i32, i32) {
    %c0_i32 = arith.constant 0 : i32
    %c0_i32_0 = arith.constant 0 : i32
    %c0_i32_1 = arith.constant 0 : i32
    return %arg0, %c0_i32, %c0_i32_0, %arg1 : i32, i32, i32, i32
  }
  func.func @transform_1(%arg0: i32, %arg1: i32) -> (i32, i32, i32) {
    %c0_i32 = arith.constant 0 : i32
    %c0_i32_0 = arith.constant 0 : i32
    %c0_i32_1 = arith.constant 0 : i32
    return %arg0, %c0_i32, %c0_i32_0 : i32, i32, i32
  }
  func.func @transform_2(%arg0: i32, %arg1: i32) -> (i32, i32, i32) {
    %c0_i32 = arith.constant 0 : i32
    %c0_i32_0 = arith.constant 0 : i32
    %c0_i32_1 = arith.constant 0 : i32
    return %arg0, %c0_i32, %c0_i32_0 : i32, i32, i32
  }
  func.func @transform_3(%arg0: i32, %arg1: i32) -> (i32, i32, i32) {
    %c0_i32 = arith.constant 0 : i32
    %c0_i32_0 = arith.constant 0 : i32
    %c0_i32_1 = arith.constant 0 : i32
    return %arg0, %c0_i32, %c0_i32_0 : i32, i32, i32
  }
}

</mosaic_0001>

<llo_original>
// kernel: tpu_custom_call.1
$region0: #{tpu_custom_call.1}
  #allocation0 [shape = 'u32[]', space=smem, size = 0x4, offset = 0x4, fixed_abs, tag = 'smem constant byte address 0x4 - core index']
  #allocation1 [shape = 'u32[144,128]{1,0:T(1,128)}', space=vmem, size = 0x12000, scoped, tag = 'internal scratch']
  %s0 = inlined_call_operand.hbm [shape: f32[2,4,8,128], index: 0, kind: input, shape index: {}]
  %s1 = inlined_call_operand.hbm [shape: s32[2,1,8], index: 1, kind: input, shape index: {}]
  %s2 = inlined_call_operand.hbm [shape: f32[2,4,8], index: 2, kind: output, shape index: {0}]
  %s3 = inlined_call_operand.hbm [shape: s32[2,4,8], index: 3, kind: output, shape index: {1}]
  %4 = xla_tuple %s2, %s3
  %s5 = sld [smem:[#allocation0]]
  $region65: #{tpu_custom_call.1} parent=0
    _
  %s7 = ssub.s32 1, %s5
  %s8 = scalar_select 0, %s7, %s5
  $region1: #{tpu_custom_call.1} parent=0
    #allocation2 [shape = 'u8[32768]{0}', space=vmem, size = 0x8000, scoped, tag = 'input window, operand 0']
    #allocation3 [shape = 's32[2]{0}', space=sflag, size = 0x8, scoped, tag = 'scoped memory for tpu_custom_call.1']
    #allocation4 [shape = 's32[2]{0}', space=sflag, size = 0x8, scoped, tag = 'scoped memory for tpu_custom_call.1']
    #allocation5 [shape = 'u8[1024]{0}', space=vmem, size = 0x400, scoped, tag = 'input window, operand 1']
    #allocation6 [shape = 's32[2]{0}', space=sflag, size = 0x8, scoped, tag = 'scoped memory for tpu_custom_call.1']
    #allocation7 [shape = 'u8[4096]{0}', space=vmem, size = 0x1000, scoped, tag = 'output window, operand 0']
    #allocation8 [shape = 'u8[4096]{0}', space=vmem, size = 0x1000, scoped, tag = 'output window, operand 1']
    #allocation9 [shape = 's32[2]{0}', space=sflag, size = 0x8, scoped, tag = 'scoped memory for tpu_custom_call.1']
    %9 = vsyncpa [#allocation3], 0
    %s10 = scalar_lea.sflag [#allocation3], 1
    %11 = vsyncpa %s10, 0
    %12 = vsyncpa [#allocation6], 0
    %s13 = scalar_lea.sflag [#allocation6], 1
    %14 = vsyncpa %s13, 0
    %15 = vsyncpa [#allocation4], 0
    %s16 = scalar_lea.sflag [#allocation4], 1
    %17 = vsyncpa %s16, 0
    %18 = vsyncpa [#allocation9], 0
    %s19 = scalar_lea.sflag [#allocation9], 1
    %20 = vsyncpa %s19, 0
    loop: start=0, step=1, limit=4
    $region2: #{tpu_custom_call.1} parent=1 // loop_pre_header
      _
    $region3: #{tpu_custom_call.1} parent=1 // loop_header
      %s22 = sphi 0, %s26
      %p23 = scmp.ge.s32.totalorder %s22, 4
      %s29 = sphi 0, %s41
      %s30 = sphi 0, %s37
      %s31 = sphi 0, %s29
      %s32 = sphi 0, %s30
      %s33 = sphi 0, %s31
      %s34 = sphi 0, %s32
      %s46 = sphi 0, %s48
      %s49 = sphi 0, %s46
      %s50 = sphi 0, %s49
      %s66 = sphi 0, %s50
      %s72 = sphi 0, %s74
      %s75 = sphi 0, %s72
      %s76 = sphi 0, %s75
      %s92 = sphi 0, %s76
      %s98 = sphi 0, %s100
      %s101 = sphi 0, %s98
      %s102 = sphi 0, %s101
      %s118 = sphi 0, %s102
      %s124 = sphi 0, %s126
      %s127 = sphi 0, %s124
      %s128 = sphi 0, %s127
      %s144 = sphi 0, %s128
    $region4: #{tpu_custom_call.1} parent=1 // loop_header_branch
      %25 = sbr.rel (%p23) target = $region8
    $region5: #{tpu_custom_call.1} parent=1 // loop_body
      %s27 = ssub.s32 %s22, 1
      %s28 = ssub.s32 %s22, 2
      %s35 = sadd.s32 1, %s30
      %p36 = scmp.ge.s32.totalorder %s35, 1
      %s37 = scalar_select %p36, 0, %s35
      %s38 = sadd.s32 1, %s29
      %s39 = scalar_select %p36, %s38, %s29
      %p40 = scmp.ge.s32.totalorder %s39, 2
      %s41 = scalar_select %p40, 0, %s39
      %s42 = ssub.s32 %s29, %s41
      %s43 = ssub.s32 %s30, %s37
      %s44 = sor.u32 %s42, %s43
      %p45 = scmp.eq.s32.totalorder %s44, 0
      %s47 = sadd.s32 %s46, 1
      %s48 = scalar_select %p45, %s46, %s47
      %p51 = pneg %p45
      %p52 = scmp.eq.s32.totalorder %s22, 1
      %p53 = por %p51, %p52
      %p54 = scmp.ne.s32.totalorder %s46, %s49
      %p55 = scmp.eq.s32.totalorder %s22, 0
      %p56 = por %p54, %p55
      %p57 = scmp.ne.s32.totalorder %s46, %s49
      %p58 = scmp.eq.s32.totalorder %s27, 1
      %p59 = por %p57, %p58
      %p60 = scmp.ne.s32.totalorder %s49, %s50
      %p61 = scmp.eq.s32.totalorder %s27, 0
      %p62 = por %p60, %p61
      %p63 = scmp.ne.s32.totalorder %s49, %s50
      %p64 = scmp.eq.s32.totalorder %s28, 1
      %p65 = por %p63, %p64
      %p67 = scmp.ne.s32.totalorder %s50, %s66
      %p68 = scmp.eq.s32.totalorder %s28, 0
      %p69 = por %p67, %p68
      %s70 = ssub.s32 %s29, %s41
      %p71 = scmp.eq.s32.totalorder %s70, 0
      %s73 = sadd.s32 %s72, 1
      %s74 = scalar_select %p71, %s72, %s73
      %p77 = pneg %p71
      %p78 = scmp.eq.s32.totalorder %s22, 1
      %p79 = por %p77, %p78
      %p80 = scmp.ne.s32.totalorder %s72, %s75
      %p81 = scmp.eq.s32.totalorder %s22, 0
      %p82 = por %p80, %p81
      %p83 = scmp.ne.s32.totalorder %s72, %s75
      %p84 = scmp.eq.s32.totalorder %s27, 1
      %p85 = por %p83, %p84
      %p86 = scmp.ne.s32.totalorder %s75, %s76
      %p87 = scmp.eq.s32.totalorder %s27, 0
      %p88 = por %p86, %p87
      %p89 = scmp.ne.s32.totalorder %s75, %s76
      %p90 = scmp.eq.s32.totalorder %s28, 1
      %p91 = por %p89, %p90
      %p93 = scmp.ne.s32.totalorder %s76, %s92
      %p94 = scmp.eq.s32.totalorder %s28, 0
      %p95 = por %p93, %p94
      %s96 = ssub.s32 %s29, %s41
      %p97 = scmp.eq.s32.totalorder %s96, 0
      %s99 = sadd.s32 %s98, 1
      %s100 = scalar_select %p97, %s98, %s99
      %p103 = pneg %p97
      %p104 = scmp.eq.s32.totalorder %s22, 1
      %p105 = por %p103, %p104
      %p106 = scmp.ne.s32.totalorder %s98, %s101
      %p107 = scmp.eq.s32.totalorder %s22, 0
      %p108 = por %p106, %p107
      %p109 = scmp.ne.s32.totalorder %s98, %s101
      %p110 = scmp.eq.s32.totalorder %s27, 1
      %p111 = por %p109, %p110
      %p112 = scmp.ne.s32.totalorder %s101, %s102
      %p113 = scmp.eq.s32.totalorder %s27, 0
      %p114 = por %p112, %p113
      %p115 = scmp.ne.s32.totalorder %s101, %s102
      %p116 = scmp.eq.s32.totalorder %s28, 1
      %p117 = por %p115, %p116
      %p119 = scmp.ne.s32.totalorder %s102, %s118
      %p120 = scmp.eq.s32.totalorder %s28, 0
      %p121 = por %p119, %p120
      %s122 = ssub.s32 %s29, %s41
      %p123 = scmp.eq.s32.totalorder %s122, 0
      %s125 = sadd.s32 %s124, 1
      %s126 = scalar_select %p123, %s124, %s125
      %p129 = pneg %p123
      %p130 = scmp.eq.s32.totalorder %s22, 1
      %p131 = por %p129, %p130
      %p132 = scmp.ne.s32.totalorder %s124, %s127
      %p133 = scmp.eq.s32.totalorder %s22, 0
      %p134 = por %p132, %p133
      %p135 = scmp.ne.s32.totalorder %s124, %s127
      %p136 = scmp.eq.s32.totalorder %s27, 1
      %p137 = por %p135, %p136
      %p138 = scmp.ne.s32.totalorder %s127, %s128
      %p139 = scmp.eq.s32.totalorder %s27, 0
      %p140 = por %p138, %p139
      %p141 = scmp.ne.s32.totalorder %s127, %s128
      %p142 = scmp.eq.s32.totalorder %s28, 1
      %p143 = por %p141, %p142
      %p145 = scmp.ne.s32.totalorder %s128, %s144
      %p146 = scmp.eq.s32.totalorder %s28, 0
      %p147 = por %p145, %p146
      %p148 = scmp.le.s32.totalorder 1, %s22
      %p149 = scmp.lt.s32.totalorder %s22, 3
      %p150 = pnand %p148, %p149
      %p151 = pneg %p150
      // Predicated region
      $region9: #{tpu_custom_call.1} parent=5 // pred_check
        _
      $region10: #{tpu_custom_call.1} parent=5 // pred_check_branch
        %153 = sbr.rel (%p150) target = $region12
      $region11: #{tpu_custom_call.1} parent=5 // pred_region
        %s154 = ssub.s32 %s22, 1
      $region12: #{tpu_custom_call.1} parent=5 // pred_fallthru
        _
      %p155 = scmp.lt.s32.totalorder %s22, 2
      // Predicated region
      $region13: #{tpu_custom_call.1} parent=5 // pred_check
        %p156 = pneg %p155
      $region14: #{tpu_custom_call.1} parent=5 // pred_check_branch
        %158 = sbr.rel (%p156) target = $region16
      $region15: #{tpu_custom_call.1} parent=5 // pred_region
        // Predicated region
        $region17: #{tpu_custom_call.1} parent=15 // pred_check
          %p159 = pneg %p56
        $region18: #{tpu_custom_call.1} parent=15 // pred_check_branch
          %161 = sbr.rel (%p159) target = $region20
        $region19: #{tpu_custom_call.1} parent=15 // pred_region
          %s162 = sand.u32 %s46, 1
          %s163 = scalar_lea.sflag [#allocation3], %s162
          %s164 = sand.u32 %s46, 1
          %s165 = smul.addr %s164, 32
          %s166 = scalar_lea.vmem [#allocation2], %s165
          %s168 = ssub.s32 512, 512
          %169 = vsyncadd %s163, %s168
          %s170 = smul.addr %s29, 4
          %s171 = sadd.s32 %s30, %s170
          %s172 = smul.addr %s171, 128
          %s173 = scalar_lea.hbm %s0, %s172
          %s174 = sshll.u32 %s166, 4
          %s175 = int_to_ptr.vmem [resolvable:$true] %s174
          %180 = dma.hbm_to_vmem [thread:$0]  %s173, 512, %s175, %s163, 128, 128, 8
        $region20: #{tpu_custom_call.1} parent=15 // pred_fallthru
          _
        // Predicated region
        $region21: #{tpu_custom_call.1} parent=15 // pred_check
          %p181 = pneg %p82
        $region22: #{tpu_custom_call.1} parent=15 // pred_check_branch
          %183 = sbr.rel (%p181) target = $region24
        $region23: #{tpu_custom_call.1} parent=15 // pred_region
          %s184 = sand.u32 %s72, 1
          %s185 = scalar_lea.sflag [#allocation6], %s184
          %s186 = sand.u32 %s72, 1
          %s187 = scalar_lea.vmem [#allocation5], %s186
          %s189 = ssub.s32 16, 16
          %190 = vsyncadd %s185, %s189
          %s191 = smul.addr %s29, 16
          %s192 = scalar_lea.hbm %s1, %s191
          %s194 = sshll.u32 %s187, 4
          %s195 = int_to_ptr.vmem [resolvable:$true] %s194
          %197 = dma.hbm_to_vmem [thread:$0]  %s192, 16, %s195, %s185
        $region24: #{tpu_custom_call.1} parent=15 // pred_fallthru
          _
      $region16: #{tpu_custom_call.1} parent=5 // pred_fallthru
        _
      %p198 = scmp.le.s32.totalorder 1, %s22
      %p199 = scmp.lt.s32.totalorder %s22, 3
      %p200 = pnand %p198, %p199
      %p201 = pneg %p200
      // Predicated region
      $region25: #{tpu_custom_call.1} parent=5 // pred_check
        _
      $region26: #{tpu_custom_call.1} parent=5 // pred_check_branch
        %203 = sbr.rel (%p200) target = $region28
      $region27: #{tpu_custom_call.1} parent=5 // pred_region
        %s204 = ssub.s32 %s22, 1
        %s205 = sand.u32 %s49, 1
        %s206 = scalar_lea.sflag [#allocation3], %s205
        %s207 = sand.u32 %s49, 1
        %s208 = smul.addr %s207, 32
        %s209 = scalar_lea.vmem [#allocation2], %s208
        // Predicated region
        $region29: #{tpu_custom_call.1} parent=27 // pred_check
          %p210 = pneg %p62
        $region30: #{tpu_custom_call.1} parent=27 // pred_check_branch
          %212 = sbr.rel (%p210) target = $region32
        $region31: #{tpu_custom_call.1} parent=27 // pred_region
          %213 = dma.done %s206, 512
        $region32: #{tpu_custom_call.1} parent=27 // pred_fallthru
          _
        %s214 = sand.u32 %s75, 1
        %s215 = scalar_lea.sflag [#allocation6], %s214
        %s216 = sand.u32 %s75, 1
        %s217 = scalar_lea.vmem [#allocation5], %s216
        // Predicated region
        $region33: #{tpu_custom_call.1} parent=27 // pred_check
          %p218 = pneg %p88
        $region34: #{tpu_custom_call.1} parent=27 // pred_check_branch
          %220 = sbr.rel (%p218) target = $region36
        $region35: #{tpu_custom_call.1} parent=27 // pred_region
          %221 = dma.done %s215, 16
        $region36: #{tpu_custom_call.1} parent=27 // pred_fallthru
          _
        %s222 = sand.u32 %s49, 1
        %s223 = scalar_lea.sflag [#allocation3], %s222
        %s224 = sand.u32 %s49, 1
        %s225 = smul.addr %s224, 32
        %s226 = scalar_lea.vmem [#allocation2], %s225
        %p227 = pneg %p62
        %p228 = pneg %p59
        %s229 = sand.u32 %s75, 1
        %s230 = scalar_lea.sflag [#allocation6], %s229
        %s231 = sand.u32 %s75, 1
        %s232 = scalar_lea.vmem [#allocation5], %s231
        %p233 = pneg %p88
        %p234 = pneg %p85
        %p235 = pneg %p114
        %p236 = pneg %p111
        %s237 = sand.u32 %s101, 1
        %s238 = scalar_lea.sflag [#allocation4], %s237
        %s239 = sand.u32 %s101, 1
        %s240 = smul.addr %s239, 4
        %s241 = scalar_lea.vmem [#allocation7], %s240
        %p242 = pneg %p140
        %p243 = pneg %p137
        %s244 = sand.u32 %s127, 1
        %s245 = scalar_lea.sflag [#allocation9], %s244
        %s246 = sand.u32 %s127, 1
        %s247 = smul.addr %s246, 4
        %s248 = scalar_lea.vmem [#allocation8], %s247
        %v249 = vld [vmem:[%s209] sm:$0xff]
        %v250 = vld [vmem:[%s209 + $0x8] sm:$0xff]
        %v251 = vld [vmem:[%s209 + $0x10] sm:$0xff]
        %v252 = vld [vmem:[%s209 + $0x18] sm:$0xff]
        %253 = vadd.xlane.f32.xlu0 %v249
        %v254 = vpop.xlane.xlu0 %253
        %255 = vadd.xlane.f32.xlu0 %v250
        %v256 = vpop.xlane.xlu0 %255
        %257 = vadd.xlane.f32.xlu0 %v251
        %v258 = vpop.xlane.xlu0 %257
        %259 = vadd.xlane.f32.xlu0 %v252
        %v260 = vpop.xlane.xlu0 %259
        %p261 = scmp.eq.s32.totalorder %s32, 0
        // Predicated region
        $region37: #{tpu_custom_call.1} parent=27 // pred_check
          %p262 = pneg %p261
        $region38: #{tpu_custom_call.1} parent=27 // pred_check_branch
          %264 = sbr.rel (%p262) target = $region40
        $region39: #{tpu_custom_call.1} parent=27 // pred_region
          %vm265 = vcmask 60416
          %266 = vst.msk [vmem:[%s241] sm:$0xf] %vm265, 0.0
        $region40: #{tpu_custom_call.1} parent=27 // pred_fallthru
          _
        %v267 = vld [vmem:[%s241] sm:$0xf]
        %v272 = vlaneseq
        %v273 = vand.u32 %v272, 127
        %v274 = vlaneseq
        %v275 = vshrl.u32 %v274, 7
        %v276 = vsub.s32 %v273, %v275
        %v277 = vrot.slane %v254, %v276
        %v278 = vlaneseq
        %v279 = vshrl.u32 %v278, 7
        %v280 = vsub.s32 %v273, %v279
        %v281 = vrot.slane %v256, %v280
        %v282 = vlaneseq
        %v283 = vshrl.u32 %v282, 7
        %v284 = vsub.s32 %v273, %v283
        %v285 = vrot.slane %v258, %v284
        %v286 = vlaneseq
        %v287 = vshrl.u32 %v286, 7
        %v288 = vsub.s32 %v273, %v287
        %v289 = vrot.slane %v260, %v288
        %vm290 = vcmask 1041409
        %v291 = vsel %vm290, %v281, %v277
        %vm292 = vcmask 1042434
        %v293 = vsel %vm292, %v285, %v291
        %vm294 = vcmask 1043459
        %v295 = vsel %vm294, %v289, %v293
        %v297 = vadd.f32 %v267, %v295
        %vm298 = vcmask 60416
        %299 = vst.msk [vmem:[%s241] sm:$0xf] %vm298, %v297
        // Predicated region
        $region41: #{tpu_custom_call.1} parent=27 // pred_check
          %p300 = pneg %p261
        $region42: #{tpu_custom_call.1} parent=27 // pred_check_branch
          %302 = sbr.rel (%p300) target = $region44
        $region43: #{tpu_custom_call.1} parent=27 // pred_region
          %v303 = vld [vmem:[%s217] sm:$0x1]
          %v304 = vld [vmem:[%s241] sm:$0xf]
          %vm305 = vcmp.eq.s32.totalorder %v303, 0
          %v306 = vsel %vm305, 1, 0
          %v307 = vlaneseq
          %v308 = vshrl.u32 %v307, 7
          %v309 = vsub.s32 0, %v308
          %v310 = vrot.slane %v306, %v309
          %vm311 = vcmp.eq.s32.totalorder %v310, 1
          %v312 = vsel %vm311, -1.0, %v304
          %313 = vst.msk [vmem:[%s241] sm:$0xf] %vm298, %v312
          %v314 = vlaneseq
          %v315 = vshrl.u32 %v314, 7
          %v316 = vsub.s32 0, %v315
          %v317 = vrot.slane %v312, %v316
          %319 = vbcast.lane.b32.xlu0 %v317, 256
          %v320 = vpop.permute.xlu0 %319
          %v321 = vlaneseq
          %v322 = vshrl.u32 %v321, 7
          %v323 = vsub.s32 1, %v322
          %v324 = vrot.slane %v312, %v323
          %326 = vbcast.lane.b32.xlu0 %v324, 256
          %v327 = vpop.permute.xlu0 %326
          %v328 = vlaneseq
          %v329 = vshrl.u32 %v328, 7
          %v330 = vsub.s32 2, %v329
          %v331 = vrot.slane %v312, %v330
          %333 = vbcast.lane.b32.xlu0 %v331, 256
          %v334 = vpop.permute.xlu0 %333
          %v335 = vlaneseq
          %v336 = vshrl.u32 %v335, 7
          %v337 = vsub.s32 3, %v336
          %v338 = vrot.slane %v312, %v337
          %340 = vbcast.lane.b32.xlu0 %v338, 256
          %v341 = vpop.permute.xlu0 %340
          %v344 = vunpack.c.l.s4 1966171168
          %v345 = vunpack.c.0.s8 %v344
          %v346 = vlaneseq
          %v347 = vshrl.u32 %v346, 7
          %v348 = vsub.s32 %v345, %v347
          %v349 = vrot.slane %v312, %v348
          %v350 = vcombine.high %v349, %v349
          %v352 = vunpack.c.l.s4 1966171168
          %v353 = vunpack.c.0.s8 %v352
          %v354 = vlaneseq
          %v355 = vshrl.u32 %v354, 7
          %v356 = vsub.s32 %v353, %v355
          %v357 = vrot.slane %v349, %v356
          %v359 = vunpack.c.l.s4 1966171168
          %v360 = vunpack.c.0.s8 %v359
          %v361 = vlaneseq
          %v362 = vshrl.u32 %v361, 7
          %v363 = vsub.s32 %v360, %v362
          %v364 = vrot.slane %v350, %v363
          %v365 = vcombine.high %v357, %v357
          %v366 = vcombine.high %v364, %v364
          %v367 = vlaneseq
          %v368 = vshrl.u32 %v367, 7
          %v369 = vlaneseq
          %v370 = vshrl.u32 %v369, 7
          %v371 = vsub.s32 0, %v370
          %v372 = vrot.slane %v357, %v371
          %v373 = vlaneseq
          %v374 = vshrl.u32 %v373, 7
          %v375 = vsub.s32 0, %v374
          %v376 = vrot.slane %v364, %v375
          %v377 = vlaneseq
          %v378 = vshrl.u32 %v377, 7
          %v379 = vsub.s32 0, %v378
          %v380 = vrot.slane %v365, %v379
          %v381 = vlaneseq
          %v382 = vshrl.u32 %v381, 7
          %v383 = vsub.s32 0, %v382
          %v384 = vrot.slane %v366, %v383
          %vm389 = vcmp.gt.f32.partialorder %v372, %v320
          %vm390 = vcmp.gt.f32.partialorder %v376, %v327
          %vm391 = vcmp.gt.f32.partialorder %v380, %v334
          %vm392 = vcmp.gt.f32.partialorder %v384, %v341
          %vm393 = vcmp.eq.f32.partialorder %v372, %v320
          %vm394 = vcmp.eq.f32.partialorder %v376, %v327
          %vm395 = vcmp.eq.f32.partialorder %v380, %v334
          %vm396 = vcmp.eq.f32.partialorder %v384, %v341
          %vm397 = vcmp.lt.s32.totalorder %v273, %v368
          %v398 = vsel %vm397, 1, 0
          %vm399 = vcmp.eq.s32.totalorder %v398, 1
          %vm400 = vmand %vm393, %vm399
          %vm401 = vmand %vm394, %vm399
          %vm402 = vmand %vm395, %vm399
          %vm403 = vmand %vm396, %vm399
          %vm404 = vmor %vm389, %vm400
          %vm405 = vmor %vm390, %vm401
          %vm406 = vmor %vm391, %vm402
          %vm407 = vmor %vm392, %vm403
          %v408 = vsel %vm404, 1, 0
          %v409 = vsel %vm405, 1, 0
          %v410 = vsel %vm406, 1, 0
          %v411 = vsel %vm407, 1, 0
          %vm412 = vcmask 64512
          %v413 = vsel %vm412, %v408, 0
          %v414 = vand.u32 %v413, 65535
          %v415 = vshrl.u32 %v413, 16
          %v416 = vcvt.s32.f32 %v414
          %v417 = vcvt.s32.f32 %v415
          %418 = vadd.xlane.f32.xlu0 %v416
          %v419 = vpop.xlane.xlu0 %418
          %420 = vadd.xlane.f32.xlu0 %v417
          %v421 = vpop.xlane.xlu0 %420
          %v422 = vcvt.f32.s32 %v419
          %v423 = vcvt.f32.s32 %v421
          %v424 = vshll.u32 %v423, 16
          %v425 = vadd.s32 %v424, %v422
          %v426 = vsel %vm412, %v409, 0
          %v427 = vand.u32 %v426, 65535
          %v428 = vshrl.u32 %v426, 16
          %v429 = vcvt.s32.f32 %v427
          %v430 = vcvt.s32.f32 %v428
          %431 = vadd.xlane.f32.xlu0 %v429
          %v432 = vpop.xlane.xlu0 %431
          %433 = vadd.xlane.f32.xlu0 %v430
          %v434 = vpop.xlane.xlu0 %433
          %v435 = vcvt.f32.s32 %v432
          %v436 = vcvt.f32.s32 %v434
          %v437 = vshll.u32 %v436, 16
          %v438 = vadd.s32 %v437, %v435
          %v439 = vsel %vm412, %v410, 0
          %v440 = vand.u32 %v439, 65535
          %v441 = vshrl.u32 %v439, 16
          %v442 = vcvt.s32.f32 %v440
          %v443 = vcvt.s32.f32 %v441
          %444 = vadd.xlane.f32.xlu0 %v442
          %v445 = vpop.xlane.xlu0 %444
          %446 = vadd.xlane.f32.xlu0 %v443
          %v447 = vpop.xlane.xlu0 %446
          %v448 = vcvt.f32.s32 %v445
          %v449 = vcvt.f32.s32 %v447
          %v450 = vshll.u32 %v449, 16
          %v451 = vadd.s32 %v450, %v448
          %v452 = vsel %vm412, %v411, 0
          %v453 = vand.u32 %v452, 65535
          %v454 = vshrl.u32 %v452, 16
          %v455 = vcvt.s32.f32 %v453
          %v456 = vcvt.s32.f32 %v454
          %457 = vadd.xlane.f32.xlu0 %v455
          %v458 = vpop.xlane.xlu0 %457
          %459 = vadd.xlane.f32.xlu0 %v456
          %v460 = vpop.xlane.xlu0 %459
          %v461 = vcvt.f32.s32 %v458
          %v462 = vcvt.f32.s32 %v460
          %v463 = vshll.u32 %v462, 16
          %v464 = vadd.s32 %v463, %v461
          %vm465 = vcmp.eq.s32.totalorder %v425, %v273
          %vm466 = vcmp.eq.s32.totalorder %v438, %v273
          %vm467 = vcmp.eq.s32.totalorder %v451, %v273
          %vm468 = vcmp.eq.s32.totalorder %v464, %v273
          %v469 = vsel %vm465, 1, 0
          %v470 = vsel %vm466, 1, 0
          %v471 = vsel %vm467, 1, 0
          %v472 = vsel %vm468, 1, 0
          %v473 = vmul.u32 %v469, %v368
          %v474 = vmul.u32 %v470, %v368
          %v475 = vmul.u32 %v471, %v368
          %v476 = vmul.u32 %v472, %v368
          %v477 = vsel %vm412, %v473, 0
          %v478 = vrot.slane %v477, 4
          %v479 = vadd.s32 %v477, %v478
          %v480 = vrot.slane %v479, 2
          %v481 = vadd.s32 %v479, %v480
          %v482 = vrot.slane %v481, 1
          %v483 = vadd.s32 %v481, %v482
          %v484 = vsel %vm412, %v474, 0
          %v485 = vrot.slane %v484, 4
          %v486 = vadd.s32 %v484, %v485
          %v487 = vrot.slane %v486, 2
          %v488 = vadd.s32 %v486, %v487
          %v489 = vrot.slane %v488, 1
          %v490 = vadd.s32 %v488, %v489
          %v491 = vsel %vm412, %v475, 0
          %v492 = vrot.slane %v491, 4
          %v493 = vadd.s32 %v491, %v492
          %v494 = vrot.slane %v493, 2
          %v495 = vadd.s32 %v493, %v494
          %v496 = vrot.slane %v495, 1
          %v497 = vadd.s32 %v495, %v496
          %v498 = vsel %vm412, %v476, 0
          %v499 = vrot.slane %v498, 4
          %v500 = vadd.s32 %v498, %v499
          %v501 = vrot.slane %v500, 2
          %v502 = vadd.s32 %v500, %v501
          %v503 = vrot.slane %v502, 1
          %v504 = vadd.s32 %v502, %v503
          %v505 = vsel %vm290, %v490, %v483
          %v506 = vsel %vm292, %v497, %v505
          %v507 = vsel %vm294, %v504, %v506
          %508 = vst.msk [vmem:[%s248] sm:$0xf] %vm298, %v507
        $region44: #{tpu_custom_call.1} parent=27 // pred_fallthru
          _
        %s509 = sand.u32 %s101, 1
        %s510 = scalar_lea.sflag [#allocation4], %s509
        %s511 = sand.u32 %s101, 1
        %s512 = smul.addr %s511, 4
        %s513 = scalar_lea.vmem [#allocation7], %s512
        %s514 = sand.u32 %s127, 1
        %s515 = scalar_lea.sflag [#allocation9], %s514
        %s516 = sand.u32 %s127, 1
        %s517 = smul.addr %s516, 4
        %s518 = scalar_lea.vmem [#allocation8], %s517
        // Predicated region
        $region45: #{tpu_custom_call.1} parent=27 // pred_check
          %p519 = pneg %p111
        $region46: #{tpu_custom_call.1} parent=27 // pred_check_branch
          %521 = sbr.rel (%p519) target = $region48
        $region47: #{tpu_custom_call.1} parent=27 // pred_region
          %s523 = ssub.s32 64, 64
          %524 = vsyncadd %s510, %s523
          %s525 = smul.addr %s31, 64
          %s526 = scalar_lea.hbm %s2, %s525
          %s528 = sshll.u32 %s513, 4
          %s529 = int_to_ptr.vmem [resolvable:$true] %s528
          %531 = dma.vmem_to_hbm [thread:$0]  %s529, 64, %s526, %s510
        $region48: #{tpu_custom_call.1} parent=27 // pred_fallthru
          _
        // Predicated region
        $region49: #{tpu_custom_call.1} parent=27 // pred_check
          %p532 = pneg %p137
        $region50: #{tpu_custom_call.1} parent=27 // pred_check_branch
          %534 = sbr.rel (%p532) target = $region52
        $region51: #{tpu_custom_call.1} parent=27 // pred_region
          %s536 = ssub.s32 64, 64
          %537 = vsyncadd %s515, %s536
          %s538 = smul.addr %s31, 64
          %s539 = scalar_lea.hbm %s3, %s538
          %s541 = sshll.u32 %s518, 4
          %s542 = int_to_ptr.vmem [resolvable:$true] %s541
          %544 = dma.vmem_to_hbm [thread:$0]  %s542, 64, %s539, %s515
        $region52: #{tpu_custom_call.1} parent=27 // pred_fallthru
          _
      $region28: #{tpu_custom_call.1} parent=5 // pred_fallthru
        _
      %p545 = scmp.le.s32.totalorder 2, %s22
      // Predicated region
      $region53: #{tpu_custom_call.1} parent=5 // pred_check
        %p546 = pneg %p545
      $region54: #{tpu_custom_call.1} parent=5 // pred_check_branch
        %548 = sbr.rel (%p546) target = $region56
      $region55: #{tpu_custom_call.1} parent=5 // pred_region
        %s549 = ssub.s32 %s22, 2
        // Predicated region
        $region57: #{tpu_custom_call.1} parent=55 // pred_check
          %p550 = pneg %p117
        $region58: #{tpu_custom_call.1} parent=55 // pred_check_branch
          %552 = sbr.rel (%p550) target = $region60
        $region59: #{tpu_custom_call.1} parent=55 // pred_region
          %s553 = sand.u32 %s102, 1
          %s554 = scalar_lea.sflag [#allocation4], %s553
          %s555 = sand.u32 %s102, 1
          %s556 = smul.addr %s555, 4
          %s557 = scalar_lea.vmem [#allocation7], %s556
          %558 = dma.done %s554, 64
        $region60: #{tpu_custom_call.1} parent=55 // pred_fallthru
          _
        // Predicated region
        $region61: #{tpu_custom_call.1} parent=55 // pred_check
          %p559 = pneg %p143
        $region62: #{tpu_custom_call.1} parent=55 // pred_check_branch
          %561 = sbr.rel (%p559) target = $region64
        $region63: #{tpu_custom_call.1} parent=55 // pred_region
          %s562 = sand.u32 %s128, 1
          %s563 = scalar_lea.sflag [#allocation9], %s562
          %s564 = sand.u32 %s128, 1
          %s565 = smul.addr %s564, 4
          %s566 = scalar_lea.vmem [#allocation8], %s565
          %567 = dma.done %s563, 64
        $region64: #{tpu_custom_call.1} parent=55 // pred_fallthru
          _
      $region56: #{tpu_custom_call.1} parent=5 // pred_fallthru
        _
    $region6: #{tpu_custom_call.1} parent=1 // loop_footer
      %s26 = sadd.s32 1, %s22
    $region7: #{tpu_custom_call.1} parent=1 // loop_footer_branch
      %21 = sbr.rel target = $region3
    $region8: #{tpu_custom_call.1} parent=1 // loop_exit
      _
    %568 = vsyncpa [#allocation3], 1
    %s569 = scalar_lea.sflag [#allocation3], 1
    %570 = vsyncpa %s569, 1
    %571 = vsyncpa [#allocation6], 1
    %s572 = scalar_lea.sflag [#allocation6], 1
    %573 = vsyncpa %s572, 1
    %574 = vsyncpa [#allocation4], 1
    %s575 = scalar_lea.sflag [#allocation4], 1
    %576 = vsyncpa %s575, 1
    %577 = vsyncpa [#allocation9], 1
    %s578 = scalar_lea.sflag [#allocation9], 1
    %579 = vsyncpa %s578, 1

</llo_original>
